<compile_context>
chip_gen: v7x
topology: tpu7x:2x2x1
jax: 0.10.0
libtpu: 0.0.40
codegen_flags: <defaults>
</compile_context>

<pallas_src>
import jax
import jax.numpy as jnp
from jax import lax
from jax.experimental import pallas as pl
from jax.experimental.pallas import tpu as pltpu

_LANE = 128
_SUBLANE = 8
_CHUNK_BASE = 1024          # rows per strip-mined inner-loop chunk (512 KiB f32)


def _round_up(x, m):
    return ((x + m - 1) // m) * m


def _chip_info():
    """Best-effort (vmem_capacity_bytes, num_tensorcores) with safe fallbacks."""
    vmem = 64 * 1024 * 1024   # conservative fallback (v7x-sized)
    cores = 1
    try:
        info = pltpu.get_tpu_info()
        try:
            v = int(getattr(info, "vmem_capacity_bytes"))
            if v > 0:
                vmem = v
        except Exception:
            pass
        for attr in ("num_cores", "core_count", "num_tensorcores", "tensorcore_count"):
            try:
                c = int(getattr(info, attr))
            except Exception:
                continue
            if 1 <= c <= 2:
                cores = c
                break
    except Exception:
        pass
    return vmem, cores


def _make_kernel(*, tiles_per_split, tile_rows, chunk_rows, rows_valid, any_overhang):
    """Partial-sum kernel: accumulates per-lane sums of squared error over the
    inner (reduction) grid axis into an (8,128) f32 accumulator; dumps it to
    the output block on the last step."""
    n_chunks = tile_rows // chunk_rows
    unroll = n_chunks <= 4

    def accumulate(pred_ref, y_ref, acc_ref, row_base, masked):
        def body(c, carry):
            r0 = pl.multiple_of(c * chunk_rows, chunk_rows)
            p = pred_ref[pl.ds(r0, chunk_rows), :].astype(jnp.float32)
            t = y_ref[pl.ds(r0, chunk_rows), :].astype(jnp.float32)
            d = p - t
            sq = d * d
            if masked:
                ridx = (row_base + r0
                        + lax.broadcasted_iota(jnp.int32, (chunk_rows, _LANE), 0))
                sq = jnp.where(ridx < rows_valid, sq, 0.0)
            # pure VPU vreg adds; no per-step cross-lane reduce, no (1,1) store
            acc_ref[...] += jnp.sum(
                sq.reshape(chunk_rows // _SUBLANE, _SUBLANE, _LANE), axis=0)
            return carry

        lax.fori_loop(0, n_chunks, body, 0, unroll=unroll)

    def kernel(pred_ref, y_ref, out_ref, acc_ref):
        s = pl.program_id(0)
        i = pl.program_id(1)

        @pl.when(i == 0)
        def _():
            acc_ref[...] = jnp.zeros_like(acc_ref)

        row_base = (s * tiles_per_split + i) * tile_rows

        if any_overhang:
            needs_mask = row_base + tile_rows > rows_valid

            @pl.when(jnp.logical_not(needs_mask))
            def _():
                accumulate(pred_ref, y_ref, acc_ref, row_base, masked=False)

            @pl.when(needs_mask)
            def _():
                accumulate(pred_ref, y_ref, acc_ref, row_base, masked=True)
        else:
            accumulate(pred_ref, y_ref, acc_ref, row_base, masked=False)

        @pl.when(i == pl.num_programs(1) - 1)
        def _():
            out_ref[...] = acc_ref[...]

    return kernel


def rmse_loss(pred, y):
    """sqrt(mean((pred - y)^2)) — semantics of torch.sqrt(nn.MSELoss()(pred, y))."""
    assert pred.shape == y.shape, "pred and y must have the same shape"
    total_elems = pred.size

    flat_p = pred.reshape(-1)
    flat_y = y.reshape(-1)
    n = flat_p.shape[0]

    # Lane alignment: only pad if n is not a multiple of 128 (at most 127 elems).
    # TODO(synk): a fully pad-free ragged-lane path would need manual DMA gather.
    lane_pad = (-n) % _LANE
    if lane_pad:
        flat_p = jnp.pad(flat_p, (0, lane_pad))
        flat_y = jnp.pad(flat_y, (0, lane_pad))
    rows = (n + lane_pad) // _LANE          # all rows [0, rows) are valid data

    itemsize = jnp.dtype(pred.dtype).itemsize
    vmem_phys, num_cores = _chip_info()

    # --- generation-aware tile sizing -------------------------------------
    # 2 inputs x 2 pipeline buffers of (tile_rows, 128) must fit comfortably.
    budget_per_buf = int(vmem_phys * 0.45) // 4
    tile_rows_big = budget_per_buf // (_LANE * itemsize)
    tile_rows_big = min(tile_rows_big, (16384 * 4) // itemsize)     # cap 8 MiB f32
    tile_rows_big = max(_CHUNK_BASE, (tile_rows_big // _CHUNK_BASE) * _CHUNK_BASE)

    row_align = 16 if itemsize >= 2 else 32
    tile_rows = min(tile_rows_big, _round_up(rows, row_align))
    chunk_rows = min(_CHUNK_BASE, tile_rows)
    tile_rows = _round_up(tile_rows, chunk_rows)

    num_tiles = pl.cdiv(rows, tile_rows)
    # Split the reduction only when the chip really has 2 TensorCores.
    num_splits = num_cores if (num_cores >= 2 and num_tiles >= 2) else 1
    tiles_per_split = pl.cdiv(num_tiles, num_splits)

    p2d = flat_p.reshape(rows, _LANE)
    y2d = flat_y.reshape(rows, _LANE)

    # Clamp the tile index so rounding of tiles_per_split never produces a
    # fully out-of-bounds block (such tiles are fully masked in-kernel anyway).
    if num_splits * tiles_per_split == num_tiles:
        def in_index_map(s, i):
            return (s * tiles_per_split + i, 0)
    else:
        last_tile = num_tiles - 1

        def in_index_map(s, i):
            return (jnp.minimum(s * tiles_per_split + i, last_tile), 0)

    any_overhang = (num_splits * tiles_per_split * tile_rows) > rows

    kernel = _make_kernel(
        tiles_per_split=tiles_per_split,
        tile_rows=tile_rows,
        chunk_rows=chunk_rows,
        rows_valid=rows,
        any_overhang=any_overhang,
    )

    if num_splits >= 2:
        dim_sem = (pltpu.CORE_PARALLEL, pltpu.ARBITRARY)   # shard split across TCs
    else:
        dim_sem = ("arbitrary", "arbitrary")

    tile_bytes = tile_rows * _LANE * itemsize
    needed = (4 * tile_bytes                      # 2 inputs x 2 buffers
              + 3 * chunk_rows * _LANE * 4        # strip-mined f32 temporaries
              + num_splits * _SUBLANE * _LANE * 4  # output
              + (1 << 20))                        # slack
    vmem_limit = max(needed * 5 // 4, 16 << 20)
    vmem_limit = min(vmem_limit, int(vmem_phys) * 3 // 4)
    vmem_limit = int(max(vmem_limit, needed))

    cost = pl.CostEstimate(
        flops=3 * total_elems,
        transcendentals=0,
        bytes_accessed=2 * total_elems * itemsize + num_splits * _SUBLANE * _LANE * 4,
    )

    in_spec = pl.BlockSpec((tile_rows, _LANE), in_index_map)

    partials = pl.pallas_call(
        kernel,
        out_shape=jax.ShapeDtypeStruct((num_splits * _SUBLANE, _LANE), jnp.float32),
        grid_spec=pltpu.PrefetchScalarGridSpec(
            num_scalar_prefetch=0,
            grid=(num_splits, tiles_per_split),
            in_specs=[in_spec, in_spec],
            out_specs=pl.BlockSpec((_SUBLANE, _LANE), lambda s, i: (s, 0)),
            scratch_shapes=[pltpu.VMEM((_SUBLANE, _LANE), jnp.float32)],
        ),
        compiler_params=pltpu.CompilerParams(
            dimension_semantics=dim_sem,
            vmem_limit_bytes=vmem_limit,
        ),
        cost_estimate=cost,
    )(p2d, y2d)

    # Tiny scalar epilogue: combine per-split/per-lane partials, mean, sqrt.
    return jnp.sqrt(jnp.sum(partials) / jnp.float32(total_elems))


if __name__ == "__main__":
    key = jax.random.PRNGKey(0)
    k1, k2 = jax.random.split(key)
    # small shapes consistent with a typical regression head (NCHW-style input)
    pred = jax.random.normal(k1, (2, 4, 16, 16), dtype=jnp.float32)
    y = jax.random.normal(k2, (2, 4, 16, 16), dtype=jnp.float32)

    loss = rmse_loss(pred, y)
    jax.block_until_ready(loss)

    # reference check in plain JAX
    ref = jnp.sqrt(jnp.mean((pred - y) ** 2))
    assert jnp.allclose(loss, ref, rtol=1e-5, atol=1e-6), (loss, ref)

    print("KERNEL_OK")
</pallas_src>

<mosaic_0001>
module attributes {stable_mosaic.version = 11 : i64} {
  func.func @kernel(%arg0: i32, %arg1: i32, %arg2: memref<16x128xf32, #tpu.memory_space<vmem>>, %arg3: memref<16x128xf32, #tpu.memory_space<vmem>>, %arg4: memref<8x128xf32, #tpu.memory_space<vmem>>, %arg5: memref<8x128xf32, #tpu.memory_space<vmem>>) attributes {dimension_semantics = [#tpu.dimension_semantics<arbitrary>, #tpu.dimension_semantics<arbitrary>], iteration_bounds = array<i64: 1, 1>, scalar_prefetch = 0 : i64, scratch_operands = 1 : i64, tpu.core_type = #tpu.core_type<tc>, window_params = [{transform_indices = @transform_0, window_bounds = array<i64: 16, 128>}, {transform_indices = @transform_1, window_bounds = array<i64: 16, 128>}, {transform_indices = @transform_2, window_bounds = array<i64: 8, 128>}]} {
    %c0_i32 = arith.constant 0 : i32
    %0 = arith.cmpi eq, %arg1, %c0_i32 : i32
    %1 = arith.extui %0 : i1 to i32
    %c0_i32_0 = arith.constant 0 : i32
    %2 = arith.cmpi ne, %1, %c0_i32_0 : i32
    scf.if %2 {
      %cst_9 = arith.constant 0.000000e+00 : f32
      %19 = vector.broadcast %cst_9 : f32 to vector<8x128xf32>
      %c0_10 = arith.constant 0 : index
      %c0_11 = arith.constant 0 : index
      %20 = vector.load %arg5[%c0_10, %c0_11] : memref<8x128xf32, #tpu.memory_space<vmem>>, vector<8x128xf32>
      tpu.vector_store %arg5[%c0_10, %c0_11], %19 {strides = array<i32>} : memref<8x128xf32, #tpu.memory_space<vmem>>, vector<8x128xf32>,
    } else {
    }
    %c0_i32_1 = arith.constant 0 : i32
    %c16_i32 = arith.constant 16 : i32
    %3 = arith.muli %c0_i32_1, %c16_i32 : i32
    %4 = tpu.assume_multiple %3, 16 : i32
    %5 = arith.index_cast %4 : i32 to index
    %c0 = arith.constant 0 : index
    %6 = vector.load %arg2[%5, %c0] : memref<16x128xf32, #tpu.memory_space<vmem>>, vector<16x128xf32>
    %7 = arith.index_cast %4 : i32 to index
    %c0_2 = arith.constant 0 : index
    %8 = vector.load %arg3[%7, %c0_2] : memref<16x128xf32, #tpu.memory_space<vmem>>, vector<16x128xf32>
    %9 = arith.subf %6, %8 : vector<16x128xf32>
    %10 = arith.mulf %9, %9 : vector<16x128xf32>
    %c0_3 = arith.constant 0 : index
    %c0_4 = arith.constant 0 : index
    %11 = vector.load %arg5[%c0_3, %c0_4] : memref<8x128xf32, #tpu.memory_space<vmem>>, vector<8x128xf32>
    %12 = vector.shape_cast %10 : vector<16x128xf32> to vector<2x8x128xf32>
    %cst = arith.constant dense<0.000000e+00> : vector<8x128xf32>
    %13 = vector.multi_reduction <add>, %12, %cst [0] : vector<2x8x128xf32> to vector<8x128xf32>
    %14 = arith.addf %11, %13 : vector<8x128xf32>
    %c0_5 = arith.constant 0 : index
    %c0_6 = arith.constant 0 : index
    %15 = vector.load %arg5[%c0_5, %c0_6] : memref<8x128xf32, #tpu.memory_space<vmem>>, vector<8x128xf32>
    tpu.vector_store %arg5[%c0_5, %c0_6], %14 {strides = array<i32>} : memref<8x128xf32, #tpu.memory_space<vmem>>, vector<8x128xf32>,
    %c1_i32 = arith.constant 1 : i32
    %c0_i32_7 = arith.constant 0 : i32
    %16 = arith.cmpi eq, %arg1, %c0_i32_7 : i32
    %17 = arith.extui %16 : i1 to i32
    %c0_i32_8 = arith.constant 0 : i32
    %18 = arith.cmpi ne, %17, %c0_i32_8 : i32
    scf.if %18 {
      %c0_9 = arith.constant 0 : index
      %c0_10 = arith.constant 0 : index
      %19 = vector.load %arg5[%c0_9, %c0_10] : memref<8x128xf32, #tpu.memory_space<vmem>>, vector<8x128xf32>
      %c0_11 = arith.constant 0 : index
      %c0_12 = arith.constant 0 : index
      %20 = vector.load %arg4[%c0_11, %c0_12] : memref<8x128xf32, #tpu.memory_space<vmem>>, vector<8x128xf32>
      tpu.vector_store %arg4[%c0_11, %c0_12], %19 {strides = array<i32>} : memref<8x128xf32, #tpu.memory_space<vmem>>, vector<8x128xf32>,
    } else {
    }
    return
  }
  func.func @transform_0(%arg0: i32, %arg1: i32) -> (i32, i32) {
    %c1_i32 = arith.constant 1 : i32
    %0 = arith.muli %arg0, %c1_i32 : i32
    %1 = arith.addi %0, %arg1 : i32
    %c0_i32 = arith.constant 0 : i32
    %c0_i32_0 = arith.constant 0 : i32
    return %1, %c0_i32 : i32, i32
  }
  func.func @transform_1(%arg0: i32, %arg1: i32) -> (i32, i32) {
    %c1_i32 = arith.constant 1 : i32
    %0 = arith.muli %arg0, %c1_i32 : i32
    %1 = arith.addi %0, %arg1 : i32
    %c0_i32 = arith.constant 0 : i32
    %c0_i32_0 = arith.constant 0 : i32
    return %1, %c0_i32 : i32, i32
  }
  func.func @transform_2(%arg0: i32, %arg1: i32) -> (i32, i32) {
    %c0_i32 = arith.constant 0 : i32
    %c0_i32_0 = arith.constant 0 : i32
    return %arg0, %c0_i32 : i32, i32
  }
}

</mosaic_0001>

<llo_original>
// kernel: tpu_custom_call.1
$region0: #{tpu_custom_call.1}
  #allocation0 [shape = 'u32[]', space=smem, size = 0x4, offset = 0x4, fixed_abs, tag = 'smem constant byte address 0x4 - core index']
  #allocation1 [shape = 'u32[144,128]{1,0:T(1,128)}', space=vmem, size = 0x12000, scoped, tag = 'internal scratch']
  #allocation2 [shape = 'f32[8,128]{1,0:T(8,128)}', space=vmem, size = 0x1000, scoped, tag = 'scratch operand']
  %s0 = inlined_call_operand.hbm [shape: f32[16,128], index: 0, kind: input, shape index: {}]
  %s1 = inlined_call_operand.hbm [shape: f32[16,128], index: 1, kind: input, shape index: {}]
  %s2 = inlined_call_operand.hbm [shape: f32[8,128], index: 2, kind: output, shape index: {}]
  %s3 = sld [smem:[#allocation0]]
  $region34: #{tpu_custom_call.1} parent=0
    _
  %s5 = ssub.s32 1, %s3
  %s6 = scalar_select 0, %s5, %s3
  $region1: #{tpu_custom_call.1} parent=0
    #allocation3 [shape = 'u8[8192]{0}', space=vmem, size = 0x2000, scoped, tag = 'input window, operand 0, single buffered']
    #allocation4 [shape = 's32[1]{0}', space=sflag, size = 0x4, scoped, tag = 'scoped memory for tpu_custom_call.1']
    #allocation5 [shape = 's32[1]{0}', space=sflag, size = 0x4, scoped, tag = 'scoped memory for tpu_custom_call.1']
    #allocation6 [shape = 'u8[8192]{0}', space=vmem, size = 0x2000, scoped, tag = 'input window, operand 1, single buffered']
    #allocation7 [shape = 's32[1]{0}', space=sflag, size = 0x4, scoped, tag = 'scoped memory for tpu_custom_call.1']
    #allocation8 [shape = 'u8[4096]{0}', space=vmem, size = 0x1000, scoped, tag = 'output window, operand 0, single buffered']
    %7 = vsyncpa [#allocation4], 0
    %8 = vsyncpa [#allocation7], 0
    %9 = vsyncpa [#allocation5], 0
    // Predicated region
    $region2: #{tpu_custom_call.1} parent=1 // pred_check
      _
    $region3: #{tpu_custom_call.1} parent=1 // pred_check_branch
      %11 = sbr.rel (0) target = $region5
    $region4: #{tpu_custom_call.1} parent=1 // pred_region
      %s12 = sadd.s32 0, 0
      %s13 = smul.u32 2, %s12
      %s15 = ssub.s32 256, 256
      %16 = vsyncadd [#allocation4], %s15
      %s17 = smul.addr %s13, 128
      %s18 = scalar_lea.hbm %s0, %s17
      %s19 = sshll.u32 [#allocation3], 4
      %s20 = int_to_ptr.vmem [resolvable:$true] %s19
      %25 = dma.hbm_to_vmem [thread:$0]  %s18, 256, %s20, [#allocation4], 128, 128, 8
    $region5: #{tpu_custom_call.1} parent=1 // pred_fallthru
      _
    // Predicated region
    $region6: #{tpu_custom_call.1} parent=1 // pred_check
      _
    $region7: #{tpu_custom_call.1} parent=1 // pred_check_branch
      %27 = sbr.rel (0) target = $region9
    $region8: #{tpu_custom_call.1} parent=1 // pred_region
      %s28 = sadd.s32 0, 0
      %s29 = smul.u32 2, %s28
      %s31 = ssub.s32 256, 256
      %32 = vsyncadd [#allocation7], %s31
      %s33 = smul.addr %s29, 128
      %s34 = scalar_lea.hbm %s1, %s33
      %s35 = sshll.u32 [#allocation6], 4
      %s36 = int_to_ptr.vmem [resolvable:$true] %s35
      %41 = dma.hbm_to_vmem [thread:$0]  %s34, 256, %s36, [#allocation7], 128, 128, 8
    $region9: #{tpu_custom_call.1} parent=1 // pred_fallthru
      _
    // Predicated region
    $region10: #{tpu_custom_call.1} parent=1 // pred_check
      _
    $region11: #{tpu_custom_call.1} parent=1 // pred_check_branch
      %43 = sbr.rel (0) target = $region13
    $region12: #{tpu_custom_call.1} parent=1 // pred_region
      %44 = dma.done [#allocation4], 256
    $region13: #{tpu_custom_call.1} parent=1 // pred_fallthru
      _
    // Predicated region
    $region14: #{tpu_custom_call.1} parent=1 // pred_check
      _
    $region15: #{tpu_custom_call.1} parent=1 // pred_check_branch
      %46 = sbr.rel (0) target = $region17
    $region16: #{tpu_custom_call.1} parent=1 // pred_region
      %47 = dma.done [#allocation7], 256
    $region17: #{tpu_custom_call.1} parent=1 // pred_fallthru
      _
    %s48 = sadd.s32 0, 0
    %s49 = smul.u32 2, %s48
    %s50 = sadd.s32 0, 0
    %s51 = smul.u32 2, %s50
    %p52 = scmp.eq.s32.totalorder 0, 0
    // Predicated region
    $region18: #{tpu_custom_call.1} parent=1 // pred_check
      %p53 = pneg %p52
    $region19: #{tpu_custom_call.1} parent=1 // pred_check_branch
      %55 = sbr.rel (%p53) target = $region21
    $region20: #{tpu_custom_call.1} parent=1 // pred_region
      %56 = vst [vmem:[#allocation2] sm:$0xff] 0.0
    $region21: #{tpu_custom_call.1} parent=1 // pred_fallthru
      _
    %v57 = vld [vmem:[#allocation3] sm:$0xff]
    %v58 = vld [vmem:[#allocation3 + $0x8] sm:$0xff]
    %v59 = vld [vmem:[#allocation6] sm:$0xff]
    %v60 = vld [vmem:[#allocation6 + $0x8] sm:$0xff]
    %v61 = vsub.f32 %v57, %v59
    %v62 = vsub.f32 %v58, %v60
    %v63 = vmul.f32 %v61, %v61
    %v64 = vmul.f32 %v62, %v62
    %v65 = vld [vmem:[#allocation2] sm:$0xff]
    %v66 = vadd.f32 %v63, %v64
    %v67 = vadd.f32 %v65, %v66
    %68 = vst [vmem:[#allocation2] sm:$0xff] %v67
    // Predicated region
    $region22: #{tpu_custom_call.1} parent=1 // pred_check
      %p69 = pneg %p52
    $region23: #{tpu_custom_call.1} parent=1 // pred_check_branch
      %71 = sbr.rel (%p69) target = $region25
    $region24: #{tpu_custom_call.1} parent=1 // pred_region
      %v72 = vld [vmem:[#allocation2] sm:$0xff]
      %73 = vst [vmem:[#allocation8] sm:$0xff] %v72
    $region25: #{tpu_custom_call.1} parent=1 // pred_fallthru
      _
    // Predicated region
    $region26: #{tpu_custom_call.1} parent=1 // pred_check
      _
    $region27: #{tpu_custom_call.1} parent=1 // pred_check_branch
      %75 = sbr.rel (0) target = $region29
    $region28: #{tpu_custom_call.1} parent=1 // pred_region
      %s77 = ssub.s32 128, 128
      %78 = vsyncadd [#allocation5], %s77
      %s80 = sshll.u32 [#allocation8], 4
      %s81 = int_to_ptr.vmem [resolvable:$true] %s80
      %83 = dma.vmem_to_hbm [thread:$0]  %s81, 128, %s2, [#allocation5]
    $region29: #{tpu_custom_call.1} parent=1 // pred_fallthru
      _
    // Predicated region
    $region30: #{tpu_custom_call.1} parent=1 // pred_check
      _
    $region31: #{tpu_custom_call.1} parent=1 // pred_check_branch
      %85 = sbr.rel (0) target = $region33
    $region32: #{tpu_custom_call.1} parent=1 // pred_region
      %86 = dma.done [#allocation5], 128
    $region33: #{tpu_custom_call.1} parent=1 // pred_fallthru
      _
    %87 = vsyncpa [#allocation4], 1
    %88 = vsyncpa [#allocation7], 1
    %89 = vsyncpa [#allocation5], 1

</llo_original>
